<compile_context>
chip_gen: v7x
topology: tpu7x:2x2x1
jax: 0.10.0
libtpu: 0.0.40
codegen_flags: <defaults>
</compile_context>

<pallas_src>
import functools

import jax
import jax.numpy as jnp
from jax.experimental import pallas as pl
from jax.experimental.pallas import tpu as pltpu


def _make_kernel(C, OC, KH, KW, Wp, Lc):
    inv_sqrt2 = 0.7071067811865476

    def kernel(x_ref, w_ref, b_ref, o_ref, patch_ref):
        # x_ref:     (1, C, Hp*Wp + KW-1)  zero-padded, row-flattened input (one image)
        # w_ref:     (OC, KH*KW*C)         im2col-flattened weights
        # b_ref:     (OC, 1)
        # o_ref:     (1, OC, Lc)           Lc = OH*Wp (padded-width output, cropped outside)
        # patch_ref: VMEM scratch (KH*KW*C, Lc) im2col buffer
        for kh in range(KH):                 # static, fully unrolled (KH*KW contiguous copies)
            for kw in range(KW):
                t = kh * KW + kw
                patch_ref[pl.ds(t * C, C), :] = x_ref[0, :, pl.ds(kh * Wp + kw, Lc)]
        # one fused matmul: (OC, K) x (K, Lc) on the MXU, f32 accumulation
        acc = jnp.dot(w_ref[...], patch_ref[...], preferred_element_type=jnp.float32)
        acc = acc + b_ref[...]               # bias, broadcast along lanes
        # exact GELU (torch.nn.GELU default): 0.5 * x * (1 + erf(x / sqrt(2)))
        y = 0.5 * acc * (1.0 + jax.lax.erf(acc * inv_sqrt2))
        o_ref[0, :, :] = y.astype(o_ref.dtype)

    return kernel


@functools.partial(jax.jit, static_argnames=("padding",))
def basic_conv(x_nchw, weight_oihw, bias, *, padding=1):
    """BasicConv forward: Conv2d(stride=1, dilation=1, groups=1, bias=True) + exact GELU."""
    N, C, H, W = x_nchw.shape
    OC, C_in, KH, KW = weight_oihw.shape
    assert C_in == C

    Hp, Wp = H + 2 * padding, W + 2 * padding
    OH, OW = Hp - KH + 1, Wp - KW + 1          # stride 1, dilation 1
    Lc = OH * Wp                               # padded-width output length (lane dim)
    Lflat = Hp * Wp + (KW - 1)                 # flat input length incl. last-tap overshoot

    # glue: one zero-pad in NCHW + free reshapes (no transpose, no NHWC detour)
    x_pad = jnp.pad(x_nchw, ((0, 0), (0, 0), (padding, padding), (padding, padding)))
    x_flat = jnp.pad(x_pad.reshape(N, C, Hp * Wp), ((0, 0), (0, 0), (0, KW - 1)))
    # weights -> (OC, KH*KW*C); row order matches the im2col buffer: (kh, kw, c)
    w_flat = jnp.transpose(weight_oihw, (0, 2, 3, 1)).reshape(OC, KH * KW * C)
    b2 = bias.reshape(OC, 1)

    kernel = _make_kernel(C, OC, KH, KW, Wp, Lc)

    out_flat = pl.pallas_call(
        kernel,
        out_shape=jax.ShapeDtypeStruct((N, OC, Lc), x_nchw.dtype),
        grid=(N,),
        in_specs=[
            pl.BlockSpec((1, C, Lflat), lambda b: (b, 0, 0)),
            pl.BlockSpec((OC, KH * KW * C), lambda b: (0, 0)),
            pl.BlockSpec((OC, 1), lambda b: (0, 0)),
        ],
        out_specs=pl.BlockSpec((1, OC, Lc), lambda b: (b, 0, 0)),
        scratch_shapes=[pltpu.VMEM((KH * KW * C, Lc), jnp.float32)],
        compiler_params=pltpu.CompilerParams(dimension_semantics=("parallel",)),
    )(x_flat, w_flat, b2)

    # crop the Wp-OW wrap-around columns; result is already NCHW
    return out_flat.reshape(N, OC, OH, Wp)[:, :, :, :OW]


def _reference(x_nchw, weight_oihw, bias, padding=1):
    """Pure-JAX reference (lax conv + exact GELU) for correctness checking."""
    y = jax.lax.conv_general_dilated(
        x_nchw, weight_oihw,
        window_strides=(1, 1),
        padding=((padding, padding), (padding, padding)),
        dimension_numbers=("NCHW", "OIHW", "NCHW"),
    )
    y = y + bias[None, :, None, None]
    return jax.nn.gelu(y, approximate=False)


if __name__ == "__main__":
    # BasicConv(in_planes=4, out_planes=8, kernel_size=3, padding=1) -> GELU, no BN
    N, C, H, W = 2, 4, 16, 16
    OC, KH, KW = 8, 3, 3
    PAD = 1

    key = jax.random.PRNGKey(0)
    kx, kw, kb = jax.random.split(key, 3)
    x = jax.random.normal(kx, (N, C, H, W), dtype=jnp.float32)
    weight = 0.1 * jax.random.normal(kw, (OC, C, KH, KW), dtype=jnp.float32)
    bias = 0.1 * jax.random.normal(kb, (OC,), dtype=jnp.float32)
    # TODO(synk): BatchNorm2d branch (bn=True) not implemented; default module config uses bn=False.

    out = basic_conv(x, weight, bias, padding=PAD)
    out = jax.block_until_ready(out)

    ref = _reference(x, weight, bias, padding=PAD)
    assert out.shape == (N, OC, H, W), out.shape
    assert jnp.allclose(out, ref, atol=1e-4, rtol=1e-4), float(jnp.max(jnp.abs(out - ref)))

    print("KERNEL_OK")
</pallas_src>

<mosaic_0001>
module attributes {stable_mosaic.version = 11 : i64} {
  func.func @kernel(%arg0: i32, %arg1: memref<1x4x326xf32, #tpu.memory_space<vmem>>, %arg2: memref<8x36xf32, #tpu.memory_space<vmem>>, %arg3: memref<8x1xf32, #tpu.memory_space<vmem>>, %arg4: memref<1x8x288xf32, #tpu.memory_space<vmem>>, %arg5: memref<36x288xf32, #tpu.memory_space<vmem>>) attributes {dimension_semantics = [#tpu.dimension_semantics<parallel>], iteration_bounds = array<i64: 2>, scalar_prefetch = 0 : i64, scratch_operands = 1 : i64, tpu.core_type = #tpu.core_type<tc>, window_params = [{transform_indices = @transform_0, window_bounds = array<i64: 1, 4, 326>}, {pipeline_mode = #tpu.pipeline_mode<synchronous>, transform_indices = @transform_1, window_bounds = array<i64: 8, 36>}, {pipeline_mode = #tpu.pipeline_mode<synchronous>, transform_indices = @transform_2, window_bounds = array<i64: 8, 1>}, {transform_indices = @transform_3, window_bounds = array<i64: 1, 8, 288>}]} {
    %c0 = arith.constant 0 : index
    %c0_0 = arith.constant 0 : index
    %c0_1 = arith.constant 0 : index
    %0 = vector.load %arg1[%c0, %c0_0, %c0_1] : memref<1x4x326xf32, #tpu.memory_space<vmem>>, vector<1x4x288xf32>
    %1 = vector.shape_cast %0 : vector<1x4x288xf32> to vector<4x288xf32>
    %c0_2 = arith.constant 0 : index
    %c0_3 = arith.constant 0 : index
    %2 = vector.load %arg5[%c0_2, %c0_3] : memref<36x288xf32, #tpu.memory_space<vmem>>, vector<4x288xf32>
    tpu.vector_store %arg5[%c0_2, %c0_3], %1 {strides = array<i32>} : memref<36x288xf32, #tpu.memory_space<vmem>>, vector<4x288xf32>,
    %c0_4 = arith.constant 0 : index
    %c0_5 = arith.constant 0 : index
    %c1 = arith.constant 1 : index
    %3 = vector.load %arg1[%c0_4, %c0_5, %c1] : memref<1x4x326xf32, #tpu.memory_space<vmem>>, vector<1x4x288xf32>
    %4 = vector.shape_cast %3 : vector<1x4x288xf32> to vector<4x288xf32>
    %c4 = arith.constant 4 : index
    %c0_6 = arith.constant 0 : index
    %5 = vector.load %arg5[%c4, %c0_6] : memref<36x288xf32, #tpu.memory_space<vmem>>, vector<4x288xf32>
    tpu.vector_store %arg5[%c4, %c0_6], %4 {strides = array<i32>} : memref<36x288xf32, #tpu.memory_space<vmem>>, vector<4x288xf32>,
    %c0_7 = arith.constant 0 : index
    %c0_8 = arith.constant 0 : index
    %c2 = arith.constant 2 : index
    %6 = vector.load %arg1[%c0_7, %c0_8, %c2] : memref<1x4x326xf32, #tpu.memory_space<vmem>>, vector<1x4x288xf32>
    %7 = vector.shape_cast %6 : vector<1x4x288xf32> to vector<4x288xf32>
    %c8 = arith.constant 8 : index
    %c0_9 = arith.constant 0 : index
    %8 = vector.load %arg5[%c8, %c0_9] : memref<36x288xf32, #tpu.memory_space<vmem>>, vector<4x288xf32>
    tpu.vector_store %arg5[%c8, %c0_9], %7 {strides = array<i32>} : memref<36x288xf32, #tpu.memory_space<vmem>>, vector<4x288xf32>,
    %c0_10 = arith.constant 0 : index
    %c0_11 = arith.constant 0 : index
    %c18 = arith.constant 18 : index
    %9 = vector.load %arg1[%c0_10, %c0_11, %c18] : memref<1x4x326xf32, #tpu.memory_space<vmem>>, vector<1x4x288xf32>
    %10 = vector.shape_cast %9 : vector<1x4x288xf32> to vector<4x288xf32>
    %c12 = arith.constant 12 : index
    %c0_12 = arith.constant 0 : index
    %11 = vector.load %arg5[%c12, %c0_12] : memref<36x288xf32, #tpu.memory_space<vmem>>, vector<4x288xf32>
    tpu.vector_store %arg5[%c12, %c0_12], %10 {strides = array<i32>} : memref<36x288xf32, #tpu.memory_space<vmem>>, vector<4x288xf32>,
    %c0_13 = arith.constant 0 : index
    %c0_14 = arith.constant 0 : index
    %c19 = arith.constant 19 : index
    %12 = vector.load %arg1[%c0_13, %c0_14, %c19] : memref<1x4x326xf32, #tpu.memory_space<vmem>>, vector<1x4x288xf32>
    %13 = vector.shape_cast %12 : vector<1x4x288xf32> to vector<4x288xf32>
    %c16 = arith.constant 16 : index
    %c0_15 = arith.constant 0 : index
    %14 = vector.load %arg5[%c16, %c0_15] : memref<36x288xf32, #tpu.memory_space<vmem>>, vector<4x288xf32>
    tpu.vector_store %arg5[%c16, %c0_15], %13 {strides = array<i32>} : memref<36x288xf32, #tpu.memory_space<vmem>>, vector<4x288xf32>,
    %c0_16 = arith.constant 0 : index
    %c0_17 = arith.constant 0 : index
    %c20 = arith.constant 20 : index
    %15 = vector.load %arg1[%c0_16, %c0_17, %c20] : memref<1x4x326xf32, #tpu.memory_space<vmem>>, vector<1x4x288xf32>
    %16 = vector.shape_cast %15 : vector<1x4x288xf32> to vector<4x288xf32>
    %c20_18 = arith.constant 20 : index
    %c0_19 = arith.constant 0 : index
    %17 = vector.load %arg5[%c20_18, %c0_19] : memref<36x288xf32, #tpu.memory_space<vmem>>, vector<4x288xf32>
    tpu.vector_store %arg5[%c20_18, %c0_19], %16 {strides = array<i32>} : memref<36x288xf32, #tpu.memory_space<vmem>>, vector<4x288xf32>,
    %c0_20 = arith.constant 0 : index
    %c0_21 = arith.constant 0 : index
    %c36 = arith.constant 36 : index
    %18 = vector.load %arg1[%c0_20, %c0_21, %c36] : memref<1x4x326xf32, #tpu.memory_space<vmem>>, vector<1x4x288xf32>
    %19 = vector.shape_cast %18 : vector<1x4x288xf32> to vector<4x288xf32>
    %c24 = arith.constant 24 : index
    %c0_22 = arith.constant 0 : index
    %20 = vector.load %arg5[%c24, %c0_22] : memref<36x288xf32, #tpu.memory_space<vmem>>, vector<4x288xf32>
    tpu.vector_store %arg5[%c24, %c0_22], %19 {strides = array<i32>} : memref<36x288xf32, #tpu.memory_space<vmem>>, vector<4x288xf32>,
    %c0_23 = arith.constant 0 : index
    %c0_24 = arith.constant 0 : index
    %c37 = arith.constant 37 : index
    %21 = vector.load %arg1[%c0_23, %c0_24, %c37] : memref<1x4x326xf32, #tpu.memory_space<vmem>>, vector<1x4x288xf32>
    %22 = vector.shape_cast %21 : vector<1x4x288xf32> to vector<4x288xf32>
    %c28 = arith.constant 28 : index
    %c0_25 = arith.constant 0 : index
    %23 = vector.load %arg5[%c28, %c0_25] : memref<36x288xf32, #tpu.memory_space<vmem>>, vector<4x288xf32>
    tpu.vector_store %arg5[%c28, %c0_25], %22 {strides = array<i32>} : memref<36x288xf32, #tpu.memory_space<vmem>>, vector<4x288xf32>,
    %c0_26 = arith.constant 0 : index
    %c0_27 = arith.constant 0 : index
    %c38 = arith.constant 38 : index
    %24 = vector.load %arg1[%c0_26, %c0_27, %c38] : memref<1x4x326xf32, #tpu.memory_space<vmem>>, vector<1x4x288xf32>
    %25 = vector.shape_cast %24 : vector<1x4x288xf32> to vector<4x288xf32>
    %c32 = arith.constant 32 : index
    %c0_28 = arith.constant 0 : index
    %26 = vector.load %arg5[%c32, %c0_28] : memref<36x288xf32, #tpu.memory_space<vmem>>, vector<4x288xf32>
    tpu.vector_store %arg5[%c32, %c0_28], %25 {strides = array<i32>} : memref<36x288xf32, #tpu.memory_space<vmem>>, vector<4x288xf32>,
    %c0_29 = arith.constant 0 : index
    %c0_30 = arith.constant 0 : index
    %27 = vector.load %arg2[%c0_29, %c0_30] : memref<8x36xf32, #tpu.memory_space<vmem>>, vector<8x36xf32>
    %c0_31 = arith.constant 0 : index
    %c0_32 = arith.constant 0 : index
    %28 = vector.load %arg5[%c0_31, %c0_32] : memref<36x288xf32, #tpu.memory_space<vmem>>, vector<36x288xf32>
    %cst = arith.constant dense<0.000000e+00> : vector<8x288xf32>
    %29 = tpu.matmul %27, %28, %cst {dimension_numbers = #tpu.dot_dimension_numbers<[1], [0], [0], [1], [0, 0, 1, 1], [], []>} : vector<8x36xf32>, vector<36x288xf32>, vector<8x288xf32> -> vector<8x288xf32>
    %c0_33 = arith.constant 0 : index
    %c0_34 = arith.constant 0 : index
    %30 = vector.load %arg3[%c0_33, %c0_34] : memref<8x1xf32, #tpu.memory_space<vmem>>, vector<8x1xf32>
    %31 = vector.broadcast %30 : vector<8x1xf32> to vector<8x288xf32>
    %32 = arith.addf %29, %31 : vector<8x288xf32>
    %cst_35 = arith.constant 5.000000e-01 : f32
    %33 = vector.broadcast %cst_35 : f32 to vector<8x288xf32>
    %34 = arith.mulf %33, %32 : vector<8x288xf32>
    %cst_36 = arith.constant 0.707106769 : f32
    %35 = vector.broadcast %cst_36 : f32 to vector<8x288xf32>
    %36 = arith.mulf %32, %35 : vector<8x288xf32>
    %37 = math.erf %36 : vector<8x288xf32>
    %cst_37 = arith.constant 1.000000e+00 : f32
    %38 = vector.broadcast %cst_37 : f32 to vector<8x288xf32>
    %39 = arith.addf %38, %37 : vector<8x288xf32>
    %40 = arith.mulf %34, %39 : vector<8x288xf32>
    %c0_38 = arith.constant 0 : index
    %c0_39 = arith.constant 0 : index
    %c0_40 = arith.constant 0 : index
    %41 = vector.load %arg4[%c0_38, %c0_39, %c0_40] : memref<1x8x288xf32, #tpu.memory_space<vmem>>, vector<1x8x288xf32>
    %42 = vector.shape_cast %41 : vector<1x8x288xf32> to vector<8x288xf32>
    %43 = vector.shape_cast %40 : vector<8x288xf32> to vector<1x8x288xf32>
    tpu.vector_store %arg4[%c0_38, %c0_39, %c0_40], %43 {strides = array<i32>} : memref<1x8x288xf32, #tpu.memory_space<vmem>>, vector<1x8x288xf32>,
    return
  }
  func.func @transform_0(%arg0: i32) -> (i32, i32, i32) {
    %c0_i32 = arith.constant 0 : i32
    %c0_i32_0 = arith.constant 0 : i32
    %c0_i32_1 = arith.constant 0 : i32
    return %arg0, %c0_i32, %c0_i32_0 : i32, i32, i32
  }
  func.func @transform_1(%arg0: i32) -> (i32, i32) {
    %c0_i32 = arith.constant 0 : i32
    %c0_i32_0 = arith.constant 0 : i32
    %c0_i32_1 = arith.constant 0 : i32
    return %c0_i32, %c0_i32_0 : i32, i32
  }
  func.func @transform_2(%arg0: i32) -> (i32, i32) {
    %c0_i32 = arith.constant 0 : i32
    %c0_i32_0 = arith.constant 0 : i32
    %c0_i32_1 = arith.constant 0 : i32
    return %c0_i32, %c0_i32_0 : i32, i32
  }
  func.func @transform_3(%arg0: i32) -> (i32, i32, i32) {
    %c0_i32 = arith.constant 0 : i32
    %c0_i32_0 = arith.constant 0 : i32
    %c0_i32_1 = arith.constant 0 : i32
    return %arg0, %c0_i32, %c0_i32_0 : i32, i32, i32
  }
}

</mosaic_0001>

<llo_original>
// kernel: basic_conv.1
$region0: #{basic_conv.1}
  #allocation0 [shape = 'u32[]', space=smem, size = 0x4, offset = 0x4, fixed_abs, tag = 'smem constant byte address 0x4 - core index']
  #allocation1 [shape = 'u32[144,128]{1,0:T(1,128)}', space=vmem, size = 0x12000, scoped, tag = 'internal scratch']
  #allocation2 [shape = 'f32[36,288]{1,0:T(8,128)}', space=vmem, size = 0xf000, scoped, tag = 'scratch operand']
  %s0 = inlined_call_operand.vmem [shape: f32[2,4,326], index: 0, kind: input, shape index: {}]
  %s1 = inlined_call_operand.vmem [shape: f32[8,36], index: 1, kind: input, shape index: {}]
  %s2 = inlined_call_operand.vmem [shape: f32[8,1], index: 2, kind: input, shape index: {}]
  %s3 = inlined_call_operand.vmem [shape: f32[2,8,288], index: 3, kind: output, shape index: {}]
  %s4 = sld [smem:[#allocation0]]
  $region45: #{basic_conv.1} parent=0
    _
  %s6 = ssub.s32 1, %s4
  %s7 = scalar_select 0, %s6, %s4
  loop: start=0, step=1, limit=4
  $region2: #{basic_conv.1} parent=0 // loop_pre_header
    _
  $region3: #{basic_conv.1} parent=0 // loop_header
    %s9 = sphi 0, %s13
    %p10 = scmp.ge.s32.totalorder %s9, 4
    %s19 = sphi 0, %s21
    %s22 = sphi 0, %s19
    %s23 = sphi 0, %s22
    %s39 = sphi 0, %s23
    %s43 = sphi 0, %s43
    %s45 = sphi 0, %s43
    %s46 = sphi 0, %s45
    %s60 = sphi 0, %s46
    %s64 = sphi 0, %s64
    %s66 = sphi 0, %s64
    %s67 = sphi 0, %s66
    %s81 = sphi 0, %s67
    %s87 = sphi 0, %s89
    %s90 = sphi 0, %s87
    %s91 = sphi 0, %s90
    %s107 = sphi 0, %s91
  $region4: #{basic_conv.1} parent=0 // loop_header_branch
    %12 = sbr.rel (%p10) target = $region8
  $region5: #{basic_conv.1} parent=0 // loop_body
    %s14 = ssub.s32 %s9, 1
    %s15 = ssub.s32 %s9, 2
    %s16 = sadd.s32 %s9, 1
    %s17 = ssub.s32 %s9, %s16
    %p18 = scmp.eq.s32.totalorder %s17, 0
    %s20 = sadd.s32 %s19, 1
    %s21 = scalar_select %p18, %s19, %s20
    %p24 = pneg %p18
    %p25 = scmp.eq.s32.totalorder %s9, 1
    %p26 = por %p24, %p25
    %p27 = scmp.ne.s32.totalorder %s19, %s22
    %p28 = scmp.eq.s32.totalorder %s9, 0
    %p29 = por %p27, %p28
    %p30 = scmp.ne.s32.totalorder %s19, %s22
    %p31 = scmp.eq.s32.totalorder %s14, 1
    %p32 = por %p30, %p31
    %p33 = scmp.ne.s32.totalorder %s22, %s23
    %p34 = scmp.eq.s32.totalorder %s14, 0
    %p35 = por %p33, %p34
    %p36 = scmp.ne.s32.totalorder %s22, %s23
    %p37 = scmp.eq.s32.totalorder %s15, 1
    %p38 = por %p36, %p37
    %p40 = scmp.ne.s32.totalorder %s23, %s39
    %p41 = scmp.eq.s32.totalorder %s15, 0
    %p42 = por %p40, %p41
    %s44 = sadd.s32 %s43, 1
    %p47 = scmp.eq.s32.totalorder %s9, 1
    %p48 = scmp.ne.s32.totalorder %s43, %s45
    %p49 = scmp.eq.s32.totalorder %s9, 0
    %p50 = por %p48, %p49
    %p51 = scmp.ne.s32.totalorder %s43, %s45
    %p52 = scmp.eq.s32.totalorder %s14, 1
    %p53 = por %p51, %p52
    %p54 = scmp.ne.s32.totalorder %s45, %s46
    %p55 = scmp.eq.s32.totalorder %s14, 0
    %p56 = por %p54, %p55
    %p57 = scmp.ne.s32.totalorder %s45, %s46
    %p58 = scmp.eq.s32.totalorder %s15, 1
    %p59 = por %p57, %p58
    %p61 = scmp.ne.s32.totalorder %s46, %s60
    %p62 = scmp.eq.s32.totalorder %s15, 0
    %p63 = por %p61, %p62
    %s65 = sadd.s32 %s64, 1
    %p68 = scmp.eq.s32.totalorder %s9, 1
    %p69 = scmp.ne.s32.totalorder %s64, %s66
    %p70 = scmp.eq.s32.totalorder %s9, 0
    %p71 = por %p69, %p70
    %p72 = scmp.ne.s32.totalorder %s64, %s66
    %p73 = scmp.eq.s32.totalorder %s14, 1
    %p74 = por %p72, %p73
    %p75 = scmp.ne.s32.totalorder %s66, %s67
    %p76 = scmp.eq.s32.totalorder %s14, 0
    %p77 = por %p75, %p76
    %p78 = scmp.ne.s32.totalorder %s66, %s67
    %p79 = scmp.eq.s32.totalorder %s15, 1
    %p80 = por %p78, %p79
    %p82 = scmp.ne.s32.totalorder %s67, %s81
    %p83 = scmp.eq.s32.totalorder %s15, 0
    %p84 = por %p82, %p83
    %s85 = ssub.s32 %s9, %s16
    %p86 = scmp.eq.s32.totalorder %s85, 0
    %s88 = sadd.s32 %s87, 1
    %s89 = scalar_select %p86, %s87, %s88
    %p92 = pneg %p86
    %p93 = scmp.eq.s32.totalorder %s9, 1
    %p94 = por %p92, %p93
    %p95 = scmp.ne.s32.totalorder %s87, %s90
    %p96 = scmp.eq.s32.totalorder %s9, 0
    %p97 = por %p95, %p96
    %p98 = scmp.ne.s32.totalorder %s87, %s90
    %p99 = scmp.eq.s32.totalorder %s14, 1
    %p100 = por %p98, %p99
    %p101 = scmp.ne.s32.totalorder %s90, %s91
    %p102 = scmp.eq.s32.totalorder %s14, 0
    %p103 = por %p101, %p102
    %p104 = scmp.ne.s32.totalorder %s90, %s91
    %p105 = scmp.eq.s32.totalorder %s15, 1
    %p106 = por %p104, %p105
    %p108 = scmp.ne.s32.totalorder %s91, %s107
    %p109 = scmp.eq.s32.totalorder %s15, 0
    %p110 = por %p108, %p109
    %p111 = scmp.le.s32.totalorder 1, %s9
    %p112 = scmp.lt.s32.totalorder %s9, 3
    %p113 = pnand %p111, %p112
    %p114 = pneg %p113
    // Predicated region
    $region9: #{basic_conv.1} parent=5 // pred_check
      _
    $region10: #{basic_conv.1} parent=5 // pred_check_branch
      %116 = sbr.rel (%p113) target = $region12
    $region11: #{basic_conv.1} parent=5 // pred_region
      %s117 = ssub.s32 %s9, 1
      // Predicated region
      $region13: #{basic_conv.1} parent=11 // pred_check
        %p118 = pneg %p56
      $region14: #{basic_conv.1} parent=11 // pred_check_branch
        %120 = sbr.rel (%p118) target = $region16
      $region15: #{basic_conv.1} parent=11 // pred_region
        _
      $region16: #{basic_conv.1} parent=11 // pred_fallthru
        _
      // Predicated region
      $region17: #{basic_conv.1} parent=11 // pred_check
        %p121 = pneg %p77
      $region18: #{basic_conv.1} parent=11 // pred_check_branch
        %123 = sbr.rel (%p121) target = $region20
      $region19: #{basic_conv.1} parent=11 // pred_region
        _
      $region20: #{basic_conv.1} parent=11 // pred_fallthru
        _
    $region12: #{basic_conv.1} parent=5 // pred_fallthru
      _
    %p124 = scmp.lt.s32.totalorder %s9, 2
    // Predicated region
    $region21: #{basic_conv.1} parent=5 // pred_check
      %p125 = pneg %p124
    $region22: #{basic_conv.1} parent=5 // pred_check_branch
      %127 = sbr.rel (%p125) target = $region24
    $region23: #{basic_conv.1} parent=5 // pred_region
      // Predicated region
      $region25: #{basic_conv.1} parent=23 // pred_check
        %p128 = pneg %p29
      $region26: #{basic_conv.1} parent=23 // pred_check_branch
        %130 = sbr.rel (%p128) target = $region28
      $region27: #{basic_conv.1} parent=23 // pred_region
        %p131 = scmp.lt.s32.totalorder %s9, 1
        %s132 = scalar_select %p131, %s9, 1
        %s133 = smul.addr %s132, 3
        %s134 = smul.addr %s133, 4
        %s135 = scalar_lea.vmem %s0, %s134
      $region28: #{basic_conv.1} parent=23 // pred_fallthru
        _
    $region24: #{basic_conv.1} parent=5 // pred_fallthru
      _
    %p136 = scmp.le.s32.totalorder 1, %s9
    %p137 = scmp.lt.s32.totalorder %s9, 3
    %p138 = pnand %p136, %p137
    %p139 = pneg %p138
    // Predicated region
    $region29: #{basic_conv.1} parent=5 // pred_check
      _
    $region30: #{basic_conv.1} parent=5 // pred_check_branch
      %141 = sbr.rel (%p138) target = $region32
    $region31: #{basic_conv.1} parent=5 // pred_region
      %s142 = ssub.s32 %s9, 1
      %p143 = scmp.lt.s32.totalorder %s14, 1
      %s144 = scalar_select %p143, %s14, 1
      %s145 = smul.addr %s144, 3
      %s146 = smul.addr %s145, 4
      %s147 = scalar_lea.vmem %s0, %s146
      %p148 = pneg %p35
      %p149 = pneg %p32
      %p150 = pneg %p56
      %p151 = pneg %p53
      %p152 = pneg %p77
      %p153 = pneg %p74
      %p154 = pneg %p103
      %p155 = pneg %p100
      %p156 = scmp.lt.s32.totalorder %s14, 1
      %s157 = scalar_select %p156, %s14, 1
      %s158 = smul.addr %s157, 3
      %s159 = smul.addr %s158, 8
      %s160 = scalar_lea.vmem %s3, %s159
      %p161 = scmp.lt.s32.totalorder %s14, 1
      %s162 = scalar_select %p161, %s14, 1
      %s163 = smul.addr %s162, 3
      %s164 = smul.addr %s163, 4
      %s165 = scalar_lea.vmem %s0, %s164
      %p166 = scmp.lt.s32.totalorder %s14, 1
      %s167 = scalar_select %p166, %s14, 1
      %s168 = smul.addr %s167, 3
      %s169 = smul.addr %s168, 8
      %s170 = scalar_lea.vmem %s3, %s169
      %v171 = vld [vmem:[%s165] sm:$0xff]
      %v172 = vld [vmem:[%s165 + $0x8] sm:$0xf]
      %v174 = vcombine.high %v171, %v171
      %176 = vst [vmem:[#allocation2] sm:$0xf] %v171
      %177 = vst [vmem:[#allocation2 + $0x8] sm:$0xf] %v174
      %vm178 = vcmask 257024
      %179 = vst.msk [vmem:[#allocation2 + $0x10] sm:$0xf] %vm178, %v172
      %v180 = vld [vmem:[%s165] sm:$0xff]
      %v181 = vld [vmem:[%s165 + $0x8] sm:$0xf]
      %v184 = vcombine.low %v180, %v180
      %v185 = vcombine.low %v181, %v181
      %186 = vrot.lane.b32.xlu0 %v184, 127
      %v187 = vpop.permute.xlu0 %186
      %188 = vrot.lane.b32.xlu0 %v180, 127
      %v189 = vpop.permute.xlu0 %188
      %190 = vrot.lane.b32.xlu0 %v185, 127
      %v191 = vpop.permute.xlu0 %190
      %vm192 = vcmask 1039360
      %v193 = vsel %vm192, %v187, %v189
      %v194 = vsel %vm192, %v189, %v191
      %198 = vst [vmem:[#allocation2] sm:$0xf0] %v193
      %199 = vst [vmem:[#allocation2 + $0x8] sm:$0xf0] %v194
      %vm200 = vcmask 261124
      %201 = vst.msk [vmem:[#allocation2 + $0x10] sm:$0xf0] %vm200, %v191
      %v202 = vld [vmem:[%s165] sm:$0xff]
      %v203 = vld [vmem:[%s165 + $0x8] sm:$0xf]
      %v206 = vcombine.high %v202, %v202
      %207 = vrot.lane.b32.xlu0 %v202, 126
      %v208 = vpop.permute.xlu0 %207
      %209 = vrot.lane.b32.xlu0 %v206, 126
      %v210 = vpop.permute.xlu0 %209
      %211 = vrot.lane.b32.xlu0 %v203, 126
      %v212 = vpop.permute.xlu0 %211
      %vm213 = vcmask 1031168
      %v214 = vsel %vm213, %v208, %v210
      %v215 = vsel %vm213, %v210, %v212
      %219 = vst [vmem:[#allocation2 + $0x18] sm:$0xf] %v214
      %220 = vst [vmem:[#allocation2 + $0x20] sm:$0xf] %v215
      %221 = vst.msk [vmem:[#allocation2 + $0x28] sm:$0xf] %vm178, %v212
      %v222 = vld [vmem:[%s165] sm:$0xff]
      %v223 = vld [vmem:[%s165 + $0x8] sm:$0xf]
      %v226 = vcombine.low %v222, %v222
      %v227 = vcombine.low %v223, %v223
      %228 = vrot.lane.b32.xlu0 %v226, 110
      %v229 = vpop.permute.xlu0 %228
      %230 = vrot.lane.b32.xlu0 %v222, 110
      %v231 = vpop.permute.xlu0 %230
      %232 = vrot.lane.b32.xlu0 %v227, 110
      %v233 = vpop.permute.xlu0 %232
      %vm234 = vcmask 900096
      %v235 = vsel %vm234, %v229, %v231
      %v236 = vsel %vm234, %v231, %v233
      %240 = vst [vmem:[#allocation2 + $0x18] sm:$0xf0] %v235
      %241 = vst [vmem:[#allocation2 + $0x20] sm:$0xf0] %v236
      %242 = vst.msk [vmem:[#allocation2 + $0x28] sm:$0xf0] %vm200, %v233
      %v243 = vld [vmem:[%s165] sm:$0xff]
      %v244 = vld [vmem:[%s165 + $0x8] sm:$0xf]
      %v247 = vcombine.high %v243, %v243
      %248 = vrot.lane.b32.xlu0 %v243, 109
      %v249 = vpop.permute.xlu0 %248
      %250 = vrot.lane.b32.xlu0 %v247, 109
      %v251 = vpop.permute.xlu0 %250
      %252 = vrot.lane.b32.xlu0 %v244, 109
      %v253 = vpop.permute.xlu0 %252
      %vm254 = vcmask 891904
      %v255 = vsel %vm254, %v249, %v251
      %v256 = vsel %vm254, %v251, %v253
      %260 = vst [vmem:[#allocation2 + $0x30] sm:$0xf] %v255
      %261 = vst [vmem:[#allocation2 + $0x38] sm:$0xf] %v256
      %262 = vst.msk [vmem:[#allocation2 + $0x40] sm:$0xf] %vm178, %v253
      %v263 = vld [vmem:[%s165] sm:$0xff]
      %v264 = vld [vmem:[%s165 + $0x8] sm:$0xf]
      %v267 = vcombine.low %v263, %v263
      %v268 = vcombine.low %v264, %v264
      %269 = vrot.lane.b32.xlu0 %v267, 108
      %v270 = vpop.permute.xlu0 %269
      %271 = vrot.lane.b32.xlu0 %v263, 108
      %v272 = vpop.permute.xlu0 %271
      %273 = vrot.lane.b32.xlu0 %v268, 108
      %v274 = vpop.permute.xlu0 %273
      %vm275 = vcmask 883712
      %v276 = vsel %vm275, %v270, %v272
      %v277 = vsel %vm275, %v272, %v274
      %281 = vst [vmem:[#allocation2 + $0x30] sm:$0xf0] %v276
      %282 = vst [vmem:[#allocation2 + $0x38] sm:$0xf0] %v277
      %283 = vst.msk [vmem:[#allocation2 + $0x40] sm:$0xf0] %vm200, %v274
      %v284 = vld [vmem:[%s165] sm:$0xff]
      %v285 = vld [vmem:[%s165 + $0x8] sm:$0xf]
      %v288 = vcombine.high %v284, %v284
      %289 = vrot.lane.b32.xlu0 %v284, 92
      %v290 = vpop.permute.xlu0 %289
      %291 = vrot.lane.b32.xlu0 %v288, 92
      %v292 = vpop.permute.xlu0 %291
      %293 = vrot.lane.b32.xlu0 %v285, 92
      %v294 = vpop.permute.xlu0 %293
      %vm295 = vcmask 752640
      %v296 = vsel %vm295, %v290, %v292
      %v297 = vsel %vm295, %v292, %v294
      %301 = vst [vmem:[#allocation2 + $0x48] sm:$0xf] %v296
      %302 = vst [vmem:[#allocation2 + $0x50] sm:$0xf] %v297
      %303 = vst.msk [vmem:[#allocation2 + $0x58] sm:$0xf] %vm178, %v294
      %v304 = vld [vmem:[%s165] sm:$0xff]
      %v305 = vld [vmem:[%s165 + $0x8] sm:$0xf]
      %v308 = vcombine.low %v304, %v304
      %v309 = vcombine.low %v305, %v305
      %310 = vrot.lane.b32.xlu0 %v308, 91
      %v311 = vpop.permute.xlu0 %310
      %312 = vrot.lane.b32.xlu0 %v304, 91
      %v313 = vpop.permute.xlu0 %312
      %314 = vrot.lane.b32.xlu0 %v309, 91
      %v315 = vpop.permute.xlu0 %314
      %vm316 = vcmask 744448
      %v317 = vsel %vm316, %v311, %v313
      %v318 = vsel %vm316, %v313, %v315
      %322 = vst [vmem:[#allocation2 + $0x48] sm:$0xf0] %v317
      %323 = vst [vmem:[#allocation2 + $0x50] sm:$0xf0] %v318
      %324 = vst.msk [vmem:[#allocation2 + $0x58] sm:$0xf0] %vm200, %v315
      %v325 = vld [vmem:[%s165] sm:$0xff]
      %v326 = vld [vmem:[%s165 + $0x8] sm:$0xf]
      %v329 = vcombine.high %v325, %v325
      %330 = vrot.lane.b32.xlu0 %v325, 90
      %v331 = vpop.permute.xlu0 %330
      %332 = vrot.lane.b32.xlu0 %v329, 90
      %v333 = vpop.permute.xlu0 %332
      %334 = vrot.lane.b32.xlu0 %v326, 90
      %v335 = vpop.permute.xlu0 %334
      %vm336 = vcmask 736256
      %v337 = vsel %vm336, %v331, %v333
      %v338 = vsel %vm336, %v333, %v335
      %342 = vst [vmem:[#allocation2 + $0x60] sm:$0xf] %v337
      %343 = vst [vmem:[#allocation2 + $0x68] sm:$0xf] %v338
      %344 = vst.msk [vmem:[#allocation2 + $0x70] sm:$0xf] %vm178, %v335
      %v345 = vld [vmem:[%s1] sm:$0xff]
      %v346 = vld [vmem:[#allocation2] sm:$0xff]
      %v347 = vld [vmem:[#allocation2 + $0x8] sm:$0xff]
      %v348 = vld [vmem:[#allocation2 + $0x10] sm:$0xff]
      %v349 = vld [vmem:[#allocation2 + $0x18] sm:$0xff]
      %v350 = vld [vmem:[#allocation2 + $0x20] sm:$0xff]
      %v351 = vld [vmem:[#allocation2 + $0x28] sm:$0xff]
      %v352 = vld [vmem:[#allocation2 + $0x30] sm:$0xff]
      %v353 = vld [vmem:[#allocation2 + $0x38] sm:$0xff]
      %v354 = vld [vmem:[#allocation2 + $0x40] sm:$0xff]
      %v355 = vld [vmem:[#allocation2 + $0x48] sm:$0xff]
      %v356 = vld [vmem:[#allocation2 + $0x50] sm:$0xff]
      %v357 = vld [vmem:[#allocation2 + $0x58] sm:$0xff]
      %v358 = vld [vmem:[#allocation2 + $0x60] sm:$0xf]
      %v359 = vld [vmem:[#allocation2 + $0x68] sm:$0xf]
      %v360 = vld [vmem:[#allocation2 + $0x70] sm:$0xf]
      %v361 = vld [vmem:[%s2] sm:$0xff]
      %363 = vset.pattern.permute.xlu0 0
      %364 = vperm.xlu0 %363, %v361
      %v365 = vpop.permute.xlu0 %364
      %vm367 = vcmask 293888
      %v369 = vsel %vm367, %v345, 0
      %vm371 = vcmask 1043456
      %v373 = vsel %vm371, %v358, 0
      %v376 = vsel %vm371, %v359, 0
      %v379 = vsel %vm371, %v360, 0
      %381 = vmatprep.subr.mxu0 %v347
      %382 = vmatpush1.msra.mxu0 %v346
      %383 = vmatprep.subr.mxu0 %v350
      %384 = vmatpush1.msra.mxu0 %v349
      %385 = vmatprep.subr.mxu0 %v353
      %386 = vmatpush1.msra.mxu0 %v352
      %387 = vmatprep.subr.mxu0 %v356
      %388 = vmatpush1.msra.mxu0 %v355
      %389 = vmatprep.subr.mxu0 %v376
      %390 = vmatpush1.msra.mxu0 %v373
      %391 = vmatprep.subr.mxu0 0.0
      %392 = vmatpush1.msra.mxu0 0.0
      %393 = vmatprep.subr.mxu0 0.0
      %394 = vmatpush1.msra.mxu0 0.0
      %395 = vmatprep.subr.mxu0 0.0
      %396 = vmatpush1.msra.mxu0 0.0
      %397 = vmatprep.subr.mxu0 0.0
      %398 = vmatpush1.msra.mxu0 0.0
      %399 = vmatprep.subr.mxu0 0.0
      %400 = vmatpush1.msra.mxu0 0.0
      %401 = vmatprep.subr.mxu0 0.0
      %402 = vmatpush1.msra.mxu0 0.0
      %403 = vmatprep.subr.mxu0 0.0
      %404 = vmatpush1.msra.mxu0 0.0
      %405 = vmatprep.subr.mxu0 0.0
      %406 = vmatpush1.msra.mxu0 0.0
      %407 = vmatprep.subr.mxu0 0.0
      %408 = vmatpush1.msra.mxu0 0.0
      %409 = vmatprep.subr.mxu0 0.0
      %410 = vmatpush1.msra.mxu0 0.0
      %411 = vmatprep.subr.mxu0 0.0
      %412 = vmatpush1.msra.mxu0 0.0
      %413 = vmatprep.subr.mxu0 0.0
      %414 = vmatpush1.msra.mxu0 0.0
      %415 = vmatprep.subr.mxu0 0.0
      %416 = vmatpush1.msra.mxu0 0.0
      %417 = vmatprep.subr.mxu0 0.0
      %418 = vmatpush1.msra.mxu0 0.0
      %419 = vmatprep.subr.mxu0 0.0
      %420 = vmatpush1.msra.mxu0 0.0
      %421 = vmatprep.subr.mxu0 0.0
      %422 = vmatpush1.msra.mxu0 0.0
      %423 = vmatprep.subr.mxu0 0.0
      %424 = vmatpush1.msra.mxu0 0.0
      %425 = vmatprep.subr.mxu0 0.0
      %426 = vmatpush1.msra.mxu0 0.0
      %427 = vmatprep.subr.mxu0 0.0
      %428 = vmatpush1.msra.mxu0 0.0
      %429 = vmatprep.subr.mxu0 0.0
      %430 = vmatpush1.msra.mxu0 0.0
      %431 = vmatprep.subr.mxu0 0.0
      %432 = vmatpush1.msra.mxu0 0.0
      %433 = vmatprep.subr.mxu0 0.0
      %434 = vmatpush1.msra.mxu0 0.0
      %435 = vmatprep.subr.mxu0 0.0
      %436 = vmatpush1.msra.mxu0 0.0
      %437 = vmatprep.subr.mxu0 0.0
      %438 = vmatpush1.msra.mxu0 0.0
      %439 = vmatprep.subr.mxu0 0.0
      %440 = vmatpush1.msra.mxu0 0.0
      %441 = vmatprep.subr.mxu0 0.0
      %442 = vmatpush1.msra.mxu0 0.0
      %443 = vmatprep.subr.mxu0 0.0
      %444 = vmatpush1.msra.mxu0 0.0
      %445 = vmatprep.mubr.f32.mxu0 0.0
      %446 = vmatmul.mubr.f32.gmra.mrb[0].mxu0 %v369
      %v447 = vpop.f32.mrb[0].mxu0
      %v448 = vadd.f32 %v365, %v447
      %v449 = vpop.f32.mrb[0].mxu0
      %v450 = vadd.f32 %v365, %v449
      %451 = vdwg.mxu0
      %452 = vmatprep.subr.mxu0 0.0
      %453 = vmatpush1.msra.mxu0 %v348
      %454 = vmatprep.subr.mxu0 0.0
      %455 = vmatpush1.msra.mxu0 %v351
      %456 = vmatprep.subr.mxu0 0.0
      %457 = vmatpush1.msra.mxu0 %v354
      %458 = vmatprep.subr.mxu0 0.0
      %459 = vmatpush1.msra.mxu0 %v357
      %460 = vmatprep.subr.mxu0 0.0
      %461 = vmatpush1.msra.mxu0 %v379
      %462 = vmatprep.subr.mxu0 0.0
      %463 = vmatpush1.msra.mxu0 0.0
      %464 = vmatprep.subr.mxu0 0.0
      %465 = vmatpush1.msra.mxu0 0.0
      %466 = vmatprep.subr.mxu0 0.0
      %467 = vmatpush1.msra.mxu0 0.0
      %468 = vmatprep.subr.mxu0 0.0
      %469 = vmatpush1.msra.mxu0 0.0
      %470 = vmatprep.subr.mxu0 0.0
      %471 = vmatpush1.msra.mxu0 0.0
      %472 = vmatprep.subr.mxu0 0.0
      %473 = vmatpush1.msra.mxu0 0.0
      %474 = vmatprep.subr.mxu0 0.0
      %475 = vmatpush1.msra.mxu0 0.0
      %476 = vmatprep.subr.mxu0 0.0
      %477 = vmatpush1.msra.mxu0 0.0
      %478 = vmatprep.subr.mxu0 0.0
      %479 = vmatpush1.msra.mxu0 0.0
      %480 = vmatprep.subr.mxu0 0.0
      %481 = vmatpush1.msra.mxu0 0.0
      %482 = vmatprep.subr.mxu0 0.0
      %483 = vmatpush1.msra.mxu0 0.0
      %484 = vmatprep.subr.mxu0 0.0
      %485 = vmatpush1.msra.mxu0 0.0
      %486 = vmatprep.subr.mxu0 0.0
      %487 = vmatpush1.msra.mxu0 0.0
      %488 = vmatprep.subr.mxu0 0.0
      %489 = vmatpush1.msra.mxu0 0.0
      %490 = vmatprep.subr.mxu0 0.0
      %491 = vmatpush1.msra.mxu0 0.0
      %492 = vmatprep.subr.mxu0 0.0
      %493 = vmatpush1.msra.mxu0 0.0
      %494 = vmatprep.subr.mxu0 0.0
      %495 = vmatpush1.msra.mxu0 0.0
      %496 = vmatprep.subr.mxu0 0.0
      %497 = vmatpush1.msra.mxu0 0.0
      %498 = vmatprep.subr.mxu0 0.0
      %499 = vmatpush1.msra.mxu0 0.0
      %500 = vmatprep.subr.mxu0 0.0
      %501 = vmatpush1.msra.mxu0 0.0
      %502 = vmatprep.subr.mxu0 0.0
      %503 = vmatpush1.msra.mxu0 0.0
      %504 = vmatprep.subr.mxu0 0.0
      %505 = vmatpush1.msra.mxu0 0.0
      %506 = vmatprep.subr.mxu0 0.0
      %507 = vmatpush1.msra.mxu0 0.0
      %508 = vmatprep.subr.mxu0 0.0
      %509 = vmatpush1.msra.mxu0 0.0
      %510 = vmatprep.subr.mxu0 0.0
      %511 = vmatpush1.msra.mxu0 0.0
      %512 = vmatprep.subr.mxu0 0.0
      %513 = vmatpush1.msra.mxu0 0.0
      %514 = vmatprep.subr.mxu0 0.0
      %515 = vmatpush1.msra.mxu0 0.0
      %516 = vmatprep.mubr.f32.mxu0 0.0
      %517 = vmatmul.mubr.f32.gmra.mrb[0].mxu0 %v369
      %v518 = vpop.f32.mrb[0].mxu0
      %v519 = vadd.f32 %v365, %v518
      %v520 = vpop.f32.mrb[0].mxu0
      %521 = vdwg.mxu0
      %v522 = vmul.f32 %v448, 0.5
      %v523 = vmul.f32 %v450, 0.5
      %v524 = vmul.f32 %v519, 0.5
      %v525 = vmul.f32 %v448, 0.70710677
      %v526 = vmul.f32 %v450, 0.70710677
      %v527 = vmul.f32 %v519, 0.70710677
      %v528 = verf.f32.pop %v525
      %v529 = verf.f32.pop %v526
      %v530 = verf.f32.pop %v527
      %v531 = vadd.f32 %v528, 1.0
      %v532 = vadd.f32 %v529, 1.0
      %v533 = vadd.f32 %v530, 1.0
      %v534 = vmul.f32 %v522, %v531
      %v535 = vmul.f32 %v523, %v532
      %v536 = vmul.f32 %v524, %v533
      %537 = vst [vmem:[%s170] sm:$0xff] %v534
      %538 = vst [vmem:[%s170 + $0x8] sm:$0xff] %v535
      %vm539 = vcmask 261120
      %540 = vst.msk [vmem:[%s170 + $0x10] sm:$0xff] %vm539, %v536
      %p541 = scmp.lt.s32.totalorder %s14, 1
      %s542 = scalar_select %p541, %s14, 1
      %s543 = smul.addr %s542, 3
      %s544 = smul.addr %s543, 8
      %s545 = scalar_lea.vmem %s3, %s544
      // Predicated region
      $region33: #{basic_conv.1} parent=31 // pred_check
        %p546 = pneg %p100
      $region34: #{basic_conv.1} parent=31 // pred_check_branch
        %548 = sbr.rel (%p546) target = $region36
      $region35: #{basic_conv.1} parent=31 // pred_region
        _
      $region36: #{basic_conv.1} parent=31 // pred_fallthru
        _
    $region32: #{basic_conv.1} parent=5 // pred_fallthru
      _
    %p549 = scmp.le.s32.totalorder 2, %s9
    // Predicated region
    $region37: #{basic_conv.1} parent=5 // pred_check
      %p550 = pneg %p549
    $region38: #{basic_conv.1} parent=5 // pred_check_branch
      %552 = sbr.rel (%p550) target = $region40
    $region39: #{basic_conv.1} parent=5 // pred_region
      %s553 = ssub.s32 %s9, 2
      // Predicated region
      $region41: #{basic_conv.1} parent=39 // pred_check
        %p554 = pneg %p106
      $region42: #{basic_conv.1} parent=39 // pred_check_branch
        %556 = sbr.rel (%p554) target = $region44
      $region43: #{basic_conv.1} parent=39 // pred_region
        %p557 = scmp.lt.s32.totalorder %s15, 1
        %s558 = scalar_select %p557, %s15, 1
        %s559 = smul.addr %s558, 3
        %s560 = smul.addr %s559, 8
        %s561 = scalar_lea.vmem %s3, %s560
      $region44: #{basic_conv.1} parent=39 // pred_fallthru
        _
    $region40: #{basic_conv.1} parent=5 // pred_fallthru
      _
  $region6: #{basic_conv.1} parent=0 // loop_footer
    %s13 = sadd.s32 1, %s9
  $region7: #{basic_conv.1} parent=0 // loop_footer_branch
    %8 = sbr.rel target = $region3
  $region8: #{basic_conv.1} parent=0 // loop_exit
    _

</llo_original>
